<compile_context>
chip_gen: v5e
topology: v5e:2x2
jax: 0.10.0
libtpu: 0.0.40
codegen_flags: <defaults>
</compile_context>

<pallas_src>
import math

import jax
import jax.numpy as jnp
from jax import lax
from jax.experimental import pallas as pl
from jax.experimental.pallas import tpu as pltpu


def _linear_kernel(x_ref, w_ref, b_ref, o_ref, acc_ref):
    """One (tm, tn) output tile, accumulating over the K grid axis.

    x_ref: (tm, tk)   activation tile
    w_ref: (tn, tk)   weight tile in native (out, in) layout
    b_ref: (1, tn)    bias tile
    o_ref: (tm, tn)   output tile
    acc_ref: (tm, tn) f32 accumulator scratch
    """
    k = pl.program_id(2)

    @pl.when(k == 0)
    def _():
        # Initialize the accumulator with the broadcast bias -> no epilogue add.
        acc_ref[...] = jnp.broadcast_to(
            b_ref[...].astype(jnp.float32), acc_ref.shape
        )

    # Contract last dim of x with last dim of w (== X @ W^T) directly on the MXU,
    # avoiding any host/XLA-side relayout of the weight.
    acc_ref[...] += lax.dot_general(
        x_ref[...],
        w_ref[...],
        dimension_numbers=(((1,), (1,)), ((), ())),
        preferred_element_type=jnp.float32,
    )

    @pl.when(k == pl.num_programs(2) - 1)
    def _():
        o_ref[...] = acc_ref[...].astype(o_ref.dtype)


def _round_up(v, m):
    return ((v + m - 1) // m) * m


def column_parallel_linear(x, weight, bias=None, *, tm=None, tn=None, tk=None):
    """x: (..., in_features); weight: (out, in); bias: (out,) -> (..., out)."""
    out_features, in_features = weight.shape
    lead_shape = x.shape[:-1]
    M = int(math.prod(lead_shape)) if lead_shape else 1

    x2d = x.reshape(M, in_features)
    if bias is None:
        bias = jnp.zeros((out_features,), dtype=x.dtype)
    b2d = bias.reshape(1, out_features)

    # ---- tile sizes ------------------------------------------------------
    # tm: cap at 256 (fills the 256-row MXU on v6e/v7x, keeps the f32 accumulator
    #     and x tiles small, and leaves >1 block on the parallel M axis for big M).
    # tn/tk: 256 / 512 defaults (lane-aligned), clamped to the (padded) problem size.
    if tm is None:
        tm = min(256, _round_up(M, 8))
    else:
        tm = max(8, _round_up(tm, 8))
    if tn is None:
        tn = min(256, _round_up(out_features, 128))
    else:
        tn = max(128, _round_up(tn, 128))
    if tk is None:
        tk = min(512, _round_up(in_features, 128))
    else:
        tk = max(128, _round_up(tk, 128))

    # ---- pad to tile multiples (correctness for non-divisible shapes) ----
    Mp = _round_up(M, tm)
    Np = _round_up(out_features, tn)
    Kp = _round_up(in_features, tk)

    if (Mp, Kp) != (M, in_features):
        x2d = jnp.pad(x2d, ((0, Mp - M), (0, Kp - in_features)))
    w = weight
    if (Np, Kp) != (out_features, in_features):
        w = jnp.pad(weight, ((0, Np - out_features), (0, Kp - in_features)))
    if Np != out_features:
        b2d = jnp.pad(b2d, ((0, 0), (0, Np - out_features)))

    grid = (Mp // tm, Np // tn, Kp // tk)

    # ---- VMEM budget (double-buffered inputs/outputs + f32 accumulator) --
    isz_in = x2d.dtype.itemsize
    isz_out = x.dtype.itemsize
    est_bytes = (
        2 * (tm * tk + tn * tk) * isz_in    # double-buffered x & w tiles
        + tm * tn * 4                       # f32 accumulator scratch
        + 2 * tm * tn * isz_out             # double-buffered output tile
        + 2 * tn * b2d.dtype.itemsize       # bias tile
    )
    vmem_limit = int(min(max(2 * est_bytes, 16 * 1024 * 1024), 48 * 1024 * 1024))

    out2d = pl.pallas_call(
        _linear_kernel,
        out_shape=jax.ShapeDtypeStruct((Mp, Np), x.dtype),
        grid_spec=pltpu.PrefetchScalarGridSpec(
            num_scalar_prefetch=0,
            grid=grid,
            in_specs=[
                pl.BlockSpec((tm, tk), lambda i, j, k: (i, k)),  # x tile
                pl.BlockSpec((tn, tk), lambda i, j, k: (j, k)),  # W tile (native layout)
                pl.BlockSpec((1, tn), lambda i, j, k: (0, j)),   # bias tile
            ],
            out_specs=pl.BlockSpec((tm, tn), lambda i, j, k: (i, j)),
            scratch_shapes=[pltpu.VMEM((tm, tn), jnp.float32)],
        ),
        compiler_params=pltpu.CompilerParams(
            dimension_semantics=("parallel", "parallel", "arbitrary"),
            vmem_limit_bytes=vmem_limit,
        ),
    )(x2d, w, b2d)

    if (Mp, Np) != (M, out_features):
        out2d = out2d[:M, :out_features]
    return out2d.reshape(*lead_shape, out_features)


def _xavier_normal(key, out_features, in_features, dtype=jnp.float32):
    # torch.nn.init.xavier_normal_ : std = gain * sqrt(2 / (fan_in + fan_out))
    std = (2.0 / (in_features + out_features)) ** 0.5
    return std * jax.random.normal(key, (out_features, in_features), dtype=dtype)


if __name__ == "__main__":
    # Module config (world_size=1 so output_size_per_partition == out_features,
    # copy/gather collectives are identities; quant=False path).
    key = jax.random.PRNGKey(0)
    kx, kw, kx2, kw2 = jax.random.split(key, 4)

    # --- case 1: tile-aligned shapes -------------------------------------
    batch, seq = 2, 8
    in_features, out_features = 128, 256

    x = jax.random.normal(kx, (batch, seq, in_features), dtype=jnp.float32)
    weight = _xavier_normal(kw, out_features, in_features)        # (out, in)
    bias = jnp.zeros((out_features,), dtype=jnp.float32)          # bias.zero_()

    y = column_parallel_linear(x, weight, bias)
    y = jax.block_until_ready(y)
    y_ref = x @ weight.T + bias
    assert y.shape == (batch, seq, out_features)
    assert jnp.allclose(y, y_ref, atol=1e-4, rtol=1e-4)

    # --- case 2: non-divisible shapes (exercises the padding path) -------
    b2, s2, k2, n2 = 3, 5, 200, 300
    x2 = jax.random.normal(kx2, (b2, s2, k2), dtype=jnp.float32)
    w2 = _xavier_normal(kw2, n2, k2)
    bb2 = 0.1 * jax.random.normal(key, (n2,), dtype=jnp.float32)

    y2 = column_parallel_linear(x2, w2, bb2)
    y2 = jax.block_until_ready(y2)
    y2_ref = x2 @ w2.T + bb2
    assert y2.shape == (b2, s2, n2)
    assert jnp.allclose(y2, y2_ref, atol=1e-4, rtol=1e-4)

    print("KERNEL_OK")
</pallas_src>

<mosaic_0001>
module attributes {stable_mosaic.version = 11 : i64} {
  func.func @_linear_kernel(%arg0: i32, %arg1: i32, %arg2: i32, %arg3: memref<16x128xf32, #tpu.memory_space<vmem>>, %arg4: memref<256x128xf32, #tpu.memory_space<vmem>>, %arg5: memref<1x256xf32, #tpu.memory_space<vmem>>, %arg6: memref<16x256xf32, #tpu.memory_space<vmem>>, %arg7: memref<16x256xf32, #tpu.memory_space<vmem>>) attributes {dimension_semantics = [#tpu.dimension_semantics<parallel>, #tpu.dimension_semantics<parallel>, #tpu.dimension_semantics<arbitrary>], iteration_bounds = array<i64: 1, 1, 1>, scalar_prefetch = 0 : i64, scratch_operands = 1 : i64, tpu.core_type = #tpu.core_type<tc>, window_params = [{transform_indices = @transform_0, window_bounds = array<i64: 16, 128>}, {transform_indices = @transform_1, window_bounds = array<i64: 256, 128>}, {transform_indices = @transform_2, window_bounds = array<i64: 1, 256>}, {transform_indices = @transform_3, window_bounds = array<i64: 16, 256>}]} {
    %c0_i32 = arith.constant 0 : i32
    %0 = arith.cmpi eq, %arg2, %c0_i32 : i32
    %1 = arith.extui %0 : i1 to i32
    %c0_i32_0 = arith.constant 0 : i32
    %2 = arith.cmpi ne, %1, %c0_i32_0 : i32
    scf.if %2 {
      %c0_10 = arith.constant 0 : index
      %c0_11 = arith.constant 0 : index
      %12 = vector.load %arg5[%c0_10, %c0_11] : memref<1x256xf32, #tpu.memory_space<vmem>>, vector<1x256xf32>
      %13 = vector.shape_cast %12 : vector<1x256xf32> to vector<1x256xf32>
      %14 = vector.broadcast %13 : vector<1x256xf32> to vector<16x256xf32>
      %c0_12 = arith.constant 0 : index
      %c0_13 = arith.constant 0 : index
      %15 = vector.load %arg7[%c0_12, %c0_13] : memref<16x256xf32, #tpu.memory_space<vmem>>, vector<16x256xf32>
      tpu.vector_store %arg7[%c0_12, %c0_13], %14 {strides = array<i32>} : memref<16x256xf32, #tpu.memory_space<vmem>>, vector<16x256xf32>,
    } else {
    }
    %c0 = arith.constant 0 : index
    %c0_1 = arith.constant 0 : index
    %3 = vector.load %arg7[%c0, %c0_1] : memref<16x256xf32, #tpu.memory_space<vmem>>, vector<16x256xf32>
    %c0_2 = arith.constant 0 : index
    %c0_3 = arith.constant 0 : index
    %4 = vector.load %arg3[%c0_2, %c0_3] : memref<16x128xf32, #tpu.memory_space<vmem>>, vector<16x128xf32>
    %c0_4 = arith.constant 0 : index
    %c0_5 = arith.constant 0 : index
    %5 = vector.load %arg4[%c0_4, %c0_5] : memref<256x128xf32, #tpu.memory_space<vmem>>, vector<256x128xf32>
    %cst = arith.constant dense<0.000000e+00> : vector<16x256xf32>
    %6 = tpu.matmul %4, %5, %cst {dimension_numbers = #tpu.dot_dimension_numbers<[1], [1], [0], [0], [0, 0, 1, 0], [], []>} : vector<16x128xf32>, vector<256x128xf32>, vector<16x256xf32> -> vector<16x256xf32>
    %7 = arith.addf %3, %6 : vector<16x256xf32>
    %c0_6 = arith.constant 0 : index
    %c0_7 = arith.constant 0 : index
    %8 = vector.load %arg7[%c0_6, %c0_7] : memref<16x256xf32, #tpu.memory_space<vmem>>, vector<16x256xf32>
    tpu.vector_store %arg7[%c0_6, %c0_7], %7 {strides = array<i32>} : memref<16x256xf32, #tpu.memory_space<vmem>>, vector<16x256xf32>,
    %c0_i32_8 = arith.constant 0 : i32
    %9 = arith.cmpi eq, %arg2, %c0_i32_8 : i32
    %10 = arith.extui %9 : i1 to i32
    %c0_i32_9 = arith.constant 0 : i32
    %11 = arith.cmpi ne, %10, %c0_i32_9 : i32
    scf.if %11 {
      %c0_10 = arith.constant 0 : index
      %c0_11 = arith.constant 0 : index
      %12 = vector.load %arg7[%c0_10, %c0_11] : memref<16x256xf32, #tpu.memory_space<vmem>>, vector<16x256xf32>
      %c0_12 = arith.constant 0 : index
      %c0_13 = arith.constant 0 : index
      %13 = vector.load %arg6[%c0_12, %c0_13] : memref<16x256xf32, #tpu.memory_space<vmem>>, vector<16x256xf32>
      tpu.vector_store %arg6[%c0_12, %c0_13], %12 {strides = array<i32>} : memref<16x256xf32, #tpu.memory_space<vmem>>, vector<16x256xf32>,
    } else {
    }
    return
  }
  func.func @transform_0(%arg0: i32, %arg1: i32, %arg2: i32) -> (i32, i32) {
    %c0_i32 = arith.constant 0 : i32
    return %arg0, %arg2 : i32, i32
  }
  func.func @transform_1(%arg0: i32, %arg1: i32, %arg2: i32) -> (i32, i32) {
    %c0_i32 = arith.constant 0 : i32
    return %arg1, %arg2 : i32, i32
  }
  func.func @transform_2(%arg0: i32, %arg1: i32, %arg2: i32) -> (i32, i32) {
    %c0_i32 = arith.constant 0 : i32
    %c0_i32_0 = arith.constant 0 : i32
    return %c0_i32, %arg1 : i32, i32
  }
  func.func @transform_3(%arg0: i32, %arg1: i32, %arg2: i32) -> (i32, i32) {
    %c0_i32 = arith.constant 0 : i32
    return %arg0, %arg1 : i32, i32
  }
}

</mosaic_0001>

<llo_original>
// kernel: tpu_custom_call.1
$region0: #{tpu_custom_call.1}
  #allocation0 [shape = 'u32[]', space=smem, size = 0x4, offset = 0x4, fixed_abs, tag = 'smem constant byte address 0x4 - core index']
  #allocation1 [shape = 'u32[72,128]{1,0:T(1,128)}', space=vmem, size = 0x9000, scoped, tag = 'internal scratch']
  #allocation2 [shape = 'f32[16,256]{1,0:T(8,128)}', space=vmem, size = 0x4000, scoped, tag = 'scratch operand']
  %s0 = inlined_call_operand.hbm [shape: f32[16,128], index: 0, kind: input, shape index: {}]
  %s1 = inlined_call_operand.hbm [shape: f32[256,128], index: 1, kind: input, shape index: {}]
  %s2 = inlined_call_operand.hbm [shape: f32[1,256], index: 2, kind: input, shape index: {}]
  %s3 = inlined_call_operand.hbm [shape: f32[16,256], index: 3, kind: output, shape index: {}]
  %s4 = sld [smem:[#allocation0]]
  $region42: #{tpu_custom_call.1} parent=0
    _
  %s6 = ssub.s32 1, %s4
  %s7 = scalar_select 0, %s6, %s4
  $region1: #{tpu_custom_call.1} parent=0
    #allocation3 [shape = 'u8[8192]{0}', space=vmem, size = 0x2000, scoped, tag = 'input window, operand 0, single buffered']
    #allocation4 [shape = 's32[1]{0}', space=sflag, size = 0x4, scoped, tag = 'scoped memory for tpu_custom_call.1']
    #allocation5 [shape = 's32[1]{0}', space=sflag, size = 0x4, scoped, tag = 'scoped memory for tpu_custom_call.1']
    #allocation6 [shape = 'u8[131072]{0}', space=vmem, size = 0x20000, scoped, tag = 'input window, operand 1, single buffered']
    #allocation7 [shape = 's32[1]{0}', space=sflag, size = 0x4, scoped, tag = 'scoped memory for tpu_custom_call.1']
    #allocation8 [shape = 'u8[1024]{0}', space=vmem, size = 0x400, scoped, tag = 'input window, operand 2, single buffered']
    #allocation9 [shape = 'u8[16384]{0}', space=vmem, size = 0x4000, scoped, tag = 'output window, operand 0, single buffered']
    %8 = vsyncpa [#allocation4], 0
    %9 = vsyncpa [#allocation7], 0
    %10 = vsyncpa [#allocation5], 0
    // Predicated region
    $region2: #{tpu_custom_call.1} parent=1 // pred_check
      _
    $region3: #{tpu_custom_call.1} parent=1 // pred_check_branch
      %12 = sbr.rel (0) target = $region5
    $region4: #{tpu_custom_call.1} parent=1 // pred_region
      %14 = vsyncadd [#allocation4], 0
      %s15 = sshll.u32 %s0, 4
      %s16 = int_to_ptr.hbm [resolvable:$true] %s15
      %s17 = sshll.u32 [#allocation3], 4
      %s18 = int_to_ptr.vmem [resolvable:$true] %s17
      %23 = dma.hbm_to_vmem [thread:$0]  %s16, 256, %s18, [#allocation4], 128, 128, 8
    $region5: #{tpu_custom_call.1} parent=1 // pred_fallthru
      _
    // Predicated region
    $region6: #{tpu_custom_call.1} parent=1 // pred_check
      _
    $region7: #{tpu_custom_call.1} parent=1 // pred_check_branch
      %25 = sbr.rel (0) target = $region9
    $region8: #{tpu_custom_call.1} parent=1 // pred_region
      %27 = vsyncadd [#allocation7], 0
      %s28 = sshll.u32 %s1, 4
      %s29 = int_to_ptr.hbm [resolvable:$true] %s28
      %s30 = sshll.u32 [#allocation6], 4
      %s31 = int_to_ptr.vmem [resolvable:$true] %s30
      %36 = dma.hbm_to_vmem [thread:$0]  %s29, 4096, %s31, [#allocation7], 128, 128, 8
    $region9: #{tpu_custom_call.1} parent=1 // pred_fallthru
      _
    // Predicated region
    $region10: #{tpu_custom_call.1} parent=1 // pred_check
      _
    $region11: #{tpu_custom_call.1} parent=1 // pred_check_branch
      %38 = sbr.rel (0) target = $region13
    $region12: #{tpu_custom_call.1} parent=1 // pred_region
      %40 = vsyncadd [#allocation7], 0
      %s42 = sshll.u32 %s2, 4
      %s43 = int_to_ptr.hbm [resolvable:$true] %s42
      %s44 = sshll.u32 [#allocation8], 4
      %s45 = int_to_ptr.vmem [resolvable:$true] %s44
      %47 = dma.hbm_to_vmem [thread:$0]  %s43, 32, %s45, [#allocation7]
    $region13: #{tpu_custom_call.1} parent=1 // pred_fallthru
      _
    // Predicated region
    $region14: #{tpu_custom_call.1} parent=1 // pred_check
      _
    $region15: #{tpu_custom_call.1} parent=1 // pred_check_branch
      %49 = sbr.rel (0) target = $region17
    $region16: #{tpu_custom_call.1} parent=1 // pred_region
      %51 = dma.done [#allocation4], 256
    $region17: #{tpu_custom_call.1} parent=1 // pred_fallthru
      _
    // Predicated region
    $region18: #{tpu_custom_call.1} parent=1 // pred_check
      _
    $region19: #{tpu_custom_call.1} parent=1 // pred_check_branch
      %53 = sbr.rel (0) target = $region21
    $region20: #{tpu_custom_call.1} parent=1 // pred_region
      %55 = dma.done [#allocation7], 4096
    $region21: #{tpu_custom_call.1} parent=1 // pred_fallthru
      _
    // Predicated region
    $region22: #{tpu_custom_call.1} parent=1 // pred_check
      _
    $region23: #{tpu_custom_call.1} parent=1 // pred_check_branch
      %57 = sbr.rel (0) target = $region25
    $region24: #{tpu_custom_call.1} parent=1 // pred_region
      %59 = dma.done [#allocation7], 32
    $region25: #{tpu_custom_call.1} parent=1 // pred_fallthru
      _
    %p60 = scmp.eq.s32.totalorder 0, 0
    // Predicated region
    $region26: #{tpu_custom_call.1} parent=1 // pred_check
      %p61 = pneg %p60
    $region27: #{tpu_custom_call.1} parent=1 // pred_check_branch
      %63 = sbr.rel (%p61) target = $region29
    $region28: #{tpu_custom_call.1} parent=1 // pred_region
      %v64 = vld [vmem:[#allocation8] sm:$0x3]
      %v66 = vperm.slane %v64, 0
      %v67 = vperm.slane %v64, 1
      %70 = vst [vmem:[#allocation2] sm:$0xff] %v66
      %71 = vst [vmem:[#allocation2 + $0x8] sm:$0xff] %v67
      %72 = vst [vmem:[#allocation2 + $0x10] sm:$0xff] %v66
      %73 = vst [vmem:[#allocation2 + $0x18] sm:$0xff] %v67
    $region29: #{tpu_custom_call.1} parent=1 // pred_fallthru
      _
    %v74 = vld [vmem:[#allocation2] sm:$0xff]
    %v75 = vld [vmem:[#allocation2 + $0x8] sm:$0xff]
    %v76 = vld [vmem:[#allocation2 + $0x10] sm:$0xff]
    %v77 = vld [vmem:[#allocation2 + $0x18] sm:$0xff]
    %v78 = vld [vmem:[#allocation3] sm:$0xff]
    %v79 = vld [vmem:[#allocation3 + $0x8] sm:$0xff]
    %v80 = vld [vmem:[#allocation6] sm:$0xff]
    %v81 = vld [vmem:[#allocation6 + $0x8] sm:$0xff]
    %v82 = vld [vmem:[#allocation6 + $0x10] sm:$0xff]
    %v83 = vld [vmem:[#allocation6 + $0x18] sm:$0xff]
    %v84 = vld [vmem:[#allocation6 + $0x20] sm:$0xff]
    %v85 = vld [vmem:[#allocation6 + $0x28] sm:$0xff]
    %v86 = vld [vmem:[#allocation6 + $0x30] sm:$0xff]
    %v87 = vld [vmem:[#allocation6 + $0x38] sm:$0xff]
    %v88 = vld [vmem:[#allocation6 + $0x40] sm:$0xff]
    %v89 = vld [vmem:[#allocation6 + $0x48] sm:$0xff]
    %v90 = vld [vmem:[#allocation6 + $0x50] sm:$0xff]
    %v91 = vld [vmem:[#allocation6 + $0x58] sm:$0xff]
    %v92 = vld [vmem:[#allocation6 + $0x60] sm:$0xff]
    %v93 = vld [vmem:[#allocation6 + $0x68] sm:$0xff]
    %v94 = vld [vmem:[#allocation6 + $0x70] sm:$0xff]
    %v95 = vld [vmem:[#allocation6 + $0x78] sm:$0xff]
    %v96 = vld [vmem:[#allocation6 + $0x80] sm:$0xff]
    %v97 = vld [vmem:[#allocation6 + $0x88] sm:$0xff]
    %v98 = vld [vmem:[#allocation6 + $0x90] sm:$0xff]
    %v99 = vld [vmem:[#allocation6 + $0x98] sm:$0xff]
    %v100 = vld [vmem:[#allocation6 + $0xa0] sm:$0xff]
    %v101 = vld [vmem:[#allocation6 + $0xa8] sm:$0xff]
    %v102 = vld [vmem:[#allocation6 + $0xb0] sm:$0xff]
    %v103 = vld [vmem:[#allocation6 + $0xb8] sm:$0xff]
    %v104 = vld [vmem:[#allocation6 + $0xc0] sm:$0xff]
    %v105 = vld [vmem:[#allocation6 + $0xc8] sm:$0xff]
    %v106 = vld [vmem:[#allocation6 + $0xd0] sm:$0xff]
    %v107 = vld [vmem:[#allocation6 + $0xd8] sm:$0xff]
    %v108 = vld [vmem:[#allocation6 + $0xe0] sm:$0xff]
    %v109 = vld [vmem:[#allocation6 + $0xe8] sm:$0xff]
    %v110 = vld [vmem:[#allocation6 + $0xf0] sm:$0xff]
    %v111 = vld [vmem:[#allocation6 + $0xf8] sm:$0xff]
    %112 = vmatpush.xpose.msra.mxu0 %v95
    %113 = vmatpush.xpose.msra.mxu0 %v94
    %114 = vmatpush.xpose.msra.mxu0 %v93
    %115 = vmatpush.xpose.msra.mxu0 %v92
    %116 = vmatpush.xpose.msra.mxu0 %v91
    %117 = vmatpush.xpose.msra.mxu0 %v90
    %118 = vmatpush.xpose.msra.mxu0 %v89
    %119 = vmatpush.xpose.msra.mxu0 %v88
    %120 = vmatpush.xpose.msra.mxu0 %v87
    %121 = vmatpush.xpose.msra.mxu0 %v86
    %122 = vmatpush.xpose.msra.mxu0 %v85
    %123 = vmatpush.xpose.msra.mxu0 %v84
    %124 = vmatpush.xpose.msra.mxu0 %v83
    %125 = vmatpush.xpose.msra.mxu0 %v82
    %126 = vmatpush.xpose.msra.mxu0 %v81
    %127 = vmatpush.xpose.msra.mxu0 %v80
    %128 = vmatmul.f32.gmra.mxu0 %v78
    %v129 = vpop.f32.mrf.mxu0
    %v130 = vadd.f32 0.0, %v129
    %131 = vmatmul.f32.gmra.mxu0 %v79
    %v132 = vpop.f32.mrf.mxu0
    %v133 = vadd.f32 0.0, %v132
    %134 = vdwg.mxu0
    %135 = vmatpush.xpose.msra.mxu0 %v111
    %136 = vmatpush.xpose.msra.mxu0 %v110
    %137 = vmatpush.xpose.msra.mxu0 %v109
    %138 = vmatpush.xpose.msra.mxu0 %v108
    %139 = vmatpush.xpose.msra.mxu0 %v107
    %140 = vmatpush.xpose.msra.mxu0 %v106
    %141 = vmatpush.xpose.msra.mxu0 %v105
    %142 = vmatpush.xpose.msra.mxu0 %v104
    %143 = vmatpush.xpose.msra.mxu0 %v103
    %144 = vmatpush.xpose.msra.mxu0 %v102
    %145 = vmatpush.xpose.msra.mxu0 %v101
    %146 = vmatpush.xpose.msra.mxu0 %v100
    %147 = vmatpush.xpose.msra.mxu0 %v99
    %148 = vmatpush.xpose.msra.mxu0 %v98
    %149 = vmatpush.xpose.msra.mxu0 %v97
    %150 = vmatpush.xpose.msra.mxu0 %v96
    %151 = vmatmul.f32.gmra.mxu0 %v78
    %v152 = vpop.f32.mrf.mxu0
    %v153 = vadd.f32 0.0, %v152
    %154 = vmatmul.f32.gmra.mxu0 %v79
    %v155 = vpop.f32.mrf.mxu0
    %v156 = vadd.f32 0.0, %v155
    %157 = vdwg.mxu0
    %v158 = vadd.f32 %v74, %v130
    %v159 = vadd.f32 %v75, %v153
    %v160 = vadd.f32 %v76, %v133
    %v161 = vadd.f32 %v77, %v156
    %162 = vst [vmem:[#allocation2] sm:$0xff] %v158
    %163 = vst [vmem:[#allocation2 + $0x8] sm:$0xff] %v159
    %164 = vst [vmem:[#allocation2 + $0x10] sm:$0xff] %v160
    %165 = vst [vmem:[#allocation2 + $0x18] sm:$0xff] %v161
    // Predicated region
    $region30: #{tpu_custom_call.1} parent=1 // pred_check
      %p166 = pneg %p60
    $region31: #{tpu_custom_call.1} parent=1 // pred_check_branch
      %168 = sbr.rel (%p166) target = $region33
    $region32: #{tpu_custom_call.1} parent=1 // pred_region
      %v169 = vld [vmem:[#allocation2] sm:$0xff]
      %v170 = vld [vmem:[#allocation2 + $0x8] sm:$0xff]
      %v171 = vld [vmem:[#allocation2 + $0x10] sm:$0xff]
      %v172 = vld [vmem:[#allocation2 + $0x18] sm:$0xff]
      %173 = vst [vmem:[#allocation9] sm:$0xff] %v169
      %174 = vst [vmem:[#allocation9 + $0x8] sm:$0xff] %v170
      %175 = vst [vmem:[#allocation9 + $0x10] sm:$0xff] %v171
      %176 = vst [vmem:[#allocation9 + $0x18] sm:$0xff] %v172
    $region33: #{tpu_custom_call.1} parent=1 // pred_fallthru
      _
    // Predicated region
    $region34: #{tpu_custom_call.1} parent=1 // pred_check
      _
    $region35: #{tpu_custom_call.1} parent=1 // pred_check_branch
      %178 = sbr.rel (0) target = $region37
    $region36: #{tpu_custom_call.1} parent=1 // pred_region
      %180 = vsyncadd [#allocation5], 0
      %s181 = sshll.u32 [#allocation9], 4
      %s182 = int_to_ptr.vmem [resolvable:$true] %s181
      %s183 = sshll.u32 %s3, 4
      %s184 = int_to_ptr.hbm [resolvable:$true] %s183
      %189 = dma.vmem_to_hbm [thread:$0]  %s182, 512, %s184, [#allocation5], 256, 256, 16
    $region37: #{tpu_custom_call.1} parent=1 // pred_fallthru
      _
    // Predicated region
    $region38: #{tpu_custom_call.1} parent=1 // pred_check
      _
    $region39: #{tpu_custom_call.1} parent=1 // pred_check_branch
      %191 = sbr.rel (0) target = $region41
    $region40: #{tpu_custom_call.1} parent=1 // pred_region
      %193 = dma.done [#allocation5], 512
    $region41: #{tpu_custom_call.1} parent=1 // pred_fallthru
      _
    %194 = vsyncpa [#allocation4], 1
    %195 = vsyncpa [#allocation7], 1
    %196 = vsyncpa [#allocation5], 1

</llo_original>
